<compile_context>
chip_gen: v7x
topology: tpu7x:2x2x1
jax: 0.10.0
libtpu: 0.0.40
codegen_flags: <defaults>
</compile_context>

<pallas_src>
import jax
import jax.numpy as jnp
from jax.experimental import pallas as pl
from jax.experimental.pallas import tpu as pltpu


def spd_transform_kernel(x_ref, w_ref, o_ref):
    # x_ref : (TB, N, N)  bf16 batch block
    # w_ref : (N, M)      bf16 weight (grid-invariant, DMA'd once)
    # o_ref : (TB, M, M)  f32 output block
    TB, N, _ = x_ref.shape
    M = w_ref.shape[1]

    w = w_ref[...]  # bf16, no per-step cast

    # Dot 1: all TB batch elements fused into one MXU dot.
    #   (TB*N, N) @ (N, M) -> (TB*N, M), bf16 inputs, f32 accumulation.
    x_flat = x_ref[...].reshape(TB * N, N)          # layout-free: N % 16 == 0
    xw = jnp.dot(x_flat, w, preferred_element_type=jnp.float32)

    # Dot 2: contract N again against the *shared* W (no broadcast of W^T, no
    # TB tiny batched matmuls).  Transposing the small per-batch (N, M) blocks
    # (XLU, last-two-dims) lets the whole batch fuse into one MXU dot:
    #   (TB*M, N) @ (N, M) -> (TB*M, M).
    xw_t = jnp.swapaxes(xw.reshape(TB, N, M), -1, -2)          # (TB, M, N) f32
    xw_t2d = xw_t.reshape(TB * M, N).astype(jnp.bfloat16)      # M % 8 == 0
    out_t = jnp.dot(xw_t2d, w, preferred_element_type=jnp.float32)  # (TB*M, M)

    # out_t[b] == (W^T X_b W)^T ; transpose back so general (non-symmetric)
    # inputs stay exactly correct.
    o_ref[...] = jnp.swapaxes(out_t.reshape(TB, M, M), -1, -2).astype(o_ref.dtype)
    # Note: keep xw in f32 for dot 2 (cast only the weight side) if downstream
    # Cholesky/eig/log is sensitive to the extra bf16 rounding.


def _vmem_budget_bytes():
    """Per-chip scoped-VMEM budget with headroom (v5e/v6e: 128 MiB, v7x: 64 MiB)."""
    try:
        cap = pltpu.get_tpu_info().vmem_capacity_bytes
    except Exception:
        cap = 64 * 1024 * 1024  # conservative default (v7x per-TC physical)
    return int(cap * 3 // 4)


def _pick_block_b(B, N, M, vmem_budget_bytes):
    """Largest TB dividing B that fits the VMEM budget; keep grid >= 2 if B >= 2."""
    # Per batch element: double-buffered bf16 x block + double-buffered f32 out.
    per_b = 2 * (N * N * 2) + 2 * (M * M * 4)
    fixed = N * M * 2 + (8 << 20)  # weight + Mosaic internal-scratch headroom
    cap = max(1, (vmem_budget_bytes - fixed) // per_b)
    # Prefer >= 2 grid steps (two v7x TensorCores); shrink TB rather than G->1.
    limit = int(min(cap, B if B < 2 else B // 2))
    limit = max(limit, 1)
    tb = 1
    for d in range(1, limit + 1):
        if B % d == 0:
            tb = d  # largest divisor of B not exceeding the limit -> no padding
    return tb


def spd_transform(x, w, *, block_b=None):
    """Compute W^T @ x_b @ W for each batch element.

    x: (B, N, N) float (bf16 preferred; cast at the producer for best perf)
    w: (N, M) float32/bf16
    returns (B, M, M) float32
    """
    B, N, N2 = x.shape
    assert N == N2, "input must be (batch, input_size, input_size)"
    Nw, M = w.shape
    assert Nw == N
    # Layout-free in-kernel reshape guards (bf16 sublane tile 16, f32 tile 8).
    assert N % 16 == 0 and M % 8 == 0, "require N % 16 == 0 and M % 8 == 0"
    # TODO(synk): for unaligned N/M, pad N/M or fall back to per-batch 2-D dots.

    # bf16 streaming: halves the dominant HBM DMA.  In production this cast
    # should live at the producer so it fuses rather than adding an HBM pass.
    x_bf = x if x.dtype == jnp.bfloat16 else x.astype(jnp.bfloat16)
    w_bf = w.astype(jnp.bfloat16)  # tiny, grid-invariant, DMA'd once

    budget = _vmem_budget_bytes()
    if block_b is None:
        TB = _pick_block_b(B, N, M, budget)
    else:
        TB = block_b
        assert B % TB == 0, "block_b must divide the batch (no padding path)"
    G = B // TB

    out = pl.pallas_call(
        spd_transform_kernel,
        out_shape=jax.ShapeDtypeStruct((B, M, M), jnp.float32),
        grid_spec=pltpu.PrefetchScalarGridSpec(
            num_scalar_prefetch=0,
            grid=(G,),
            in_specs=[
                pl.BlockSpec((TB, N, N), lambda g: (g, 0, 0)),  # x batch block
                pl.BlockSpec((N, M), lambda g: (0, 0)),         # W (DMA'd once)
            ],
            out_specs=pl.BlockSpec((TB, M, M), lambda g: (g, 0, 0)),
        ),
        compiler_params=pltpu.CompilerParams(
            dimension_semantics=("parallel",),
            vmem_limit_bytes=budget,
        ),
    )(x_bf, w_bf)
    return out


def make_orthogonal_weight(key, input_size, output_size):
    """Deterministic stand-in for nn.init.orthogonal_ on a (N, M) weight."""
    a = jax.random.normal(key, (input_size, output_size), dtype=jnp.float32)
    q, r = jnp.linalg.qr(a)
    d = jnp.sign(jnp.diagonal(r))
    d = jnp.where(d == 0, 1.0, d)
    return q * d[None, :]  # (input_size, output_size), orthonormal columns


if __name__ == "__main__":
    key = jax.random.PRNGKey(0)
    k_x, k_w = jax.random.split(key)

    batch = 8
    input_size = 32
    output_size = 16

    # Symmetric (SPD) inputs, matching the module's domain.
    a = jax.random.normal(k_x, (batch, input_size, input_size), dtype=jnp.float32)
    x = jnp.einsum("bij,bkj->bik", a, a) / input_size           # (B, N, N) SPD f32
    w = make_orthogonal_weight(k_w, input_size, output_size)    # (N, M) f32

    # Producer-side cast: the kernel streams x in bf16.
    x_bf = x.astype(jnp.bfloat16)

    out = jax.block_until_ready(spd_transform(x_bf, w))
    assert out.shape == (batch, output_size, output_size)

    # Check 1: f32 forward semantics (loose tol: kernel uses bf16 MXU inputs).
    ref_f32 = jnp.einsum("nm,bnk,kp->bmp", w, x, w)
    assert jnp.allclose(out, ref_f32, atol=1e-1, rtol=1e-1)

    # Check 2: reference with the same bf16 input/intermediate rounding -> tight tol.
    xb = x_bf.astype(jnp.float32)
    wb = w.astype(jnp.bfloat16).astype(jnp.float32)
    xw_ref = jnp.einsum("bnk,km->bnm", xb, wb,
                        precision=jax.lax.Precision.HIGHEST)
    xw_ref = xw_ref.astype(jnp.bfloat16).astype(jnp.float32)
    ref_bf16 = jnp.einsum("nm,bnp->bmp", wb, xw_ref,
                          precision=jax.lax.Precision.HIGHEST)
    assert jnp.allclose(out, ref_bf16, atol=2e-3, rtol=2e-3)

    print("KERNEL_OK")
</pallas_src>

<mosaic_0001>
module attributes {stable_mosaic.version = 11 : i64} {
  func.func @spd_transform_kernel(%arg0: i32, %arg1: memref<4x32x32xbf16, #tpu.memory_space<vmem>>, %arg2: memref<32x16xbf16, #tpu.memory_space<vmem>>, %arg3: memref<4x16x16xf32, #tpu.memory_space<vmem>>) attributes {dimension_semantics = [#tpu.dimension_semantics<parallel>], iteration_bounds = array<i64: 2>, scalar_prefetch = 0 : i64, scratch_operands = 0 : i64, tpu.core_type = #tpu.core_type<tc>, window_params = [{transform_indices = @transform_0, window_bounds = array<i64: 4, 32, 32>}, {pipeline_mode = #tpu.pipeline_mode<synchronous>, transform_indices = @transform_1, window_bounds = array<i64: 32, 16>}, {transform_indices = @transform_2, window_bounds = array<i64: 4, 16, 16>}]} {
    %c0 = arith.constant 0 : index
    %c0_0 = arith.constant 0 : index
    %0 = vector.load %arg2[%c0, %c0_0] : memref<32x16xbf16, #tpu.memory_space<vmem>>, vector<32x16xbf16>
    %c0_1 = arith.constant 0 : index
    %c0_2 = arith.constant 0 : index
    %c0_3 = arith.constant 0 : index
    %1 = vector.load %arg1[%c0_1, %c0_2, %c0_3] : memref<4x32x32xbf16, #tpu.memory_space<vmem>>, vector<4x32x32xbf16>
    %2 = vector.shape_cast %1 : vector<4x32x32xbf16> to vector<128x32xbf16>
    %cst = arith.constant dense<0.000000e+00> : vector<128x16xf32>
    %3 = tpu.matmul %2, %0, %cst {dimension_numbers = #tpu.dot_dimension_numbers<[1], [0], [0], [1], [0, 0, 1, 1], [], []>} : vector<128x32xbf16>, vector<32x16xbf16>, vector<128x16xf32> -> vector<128x16xf32>
    %4 = vector.shape_cast %3 : vector<128x16xf32> to vector<4x32x16xf32>
    %5 = tpu.transpose %4, [0, 2, 1] : vector<4x32x16xf32> -> vector<4x16x32xf32>
    %6 = vector.shape_cast %5 : vector<4x16x32xf32> to vector<64x32xf32>
    %7 = arith.truncf %6 : vector<64x32xf32> to vector<64x32xbf16>
    %cst_4 = arith.constant dense<0.000000e+00> : vector<64x16xf32>
    %8 = tpu.matmul %7, %0, %cst_4 {dimension_numbers = #tpu.dot_dimension_numbers<[1], [0], [0], [1], [0, 0, 1, 1], [], []>} : vector<64x32xbf16>, vector<32x16xbf16>, vector<64x16xf32> -> vector<64x16xf32>
    %9 = vector.shape_cast %8 : vector<64x16xf32> to vector<4x16x16xf32>
    %10 = tpu.transpose %9, [0, 2, 1] : vector<4x16x16xf32> -> vector<4x16x16xf32>
    %c0_5 = arith.constant 0 : index
    %c0_6 = arith.constant 0 : index
    %c0_7 = arith.constant 0 : index
    %11 = vector.load %arg3[%c0_5, %c0_6, %c0_7] : memref<4x16x16xf32, #tpu.memory_space<vmem>>, vector<4x16x16xf32>
    tpu.vector_store %arg3[%c0_5, %c0_6, %c0_7], %10 {strides = array<i32>} : memref<4x16x16xf32, #tpu.memory_space<vmem>>, vector<4x16x16xf32>,
    return
  }
  func.func @transform_0(%arg0: i32) -> (i32, i32, i32) {
    %c0_i32 = arith.constant 0 : i32
    %c0_i32_0 = arith.constant 0 : i32
    %c0_i32_1 = arith.constant 0 : i32
    return %arg0, %c0_i32, %c0_i32_0 : i32, i32, i32
  }
  func.func @transform_1(%arg0: i32) -> (i32, i32) {
    %c0_i32 = arith.constant 0 : i32
    %c0_i32_0 = arith.constant 0 : i32
    %c0_i32_1 = arith.constant 0 : i32
    return %c0_i32, %c0_i32_0 : i32, i32
  }
  func.func @transform_2(%arg0: i32) -> (i32, i32, i32) {
    %c0_i32 = arith.constant 0 : i32
    %c0_i32_0 = arith.constant 0 : i32
    %c0_i32_1 = arith.constant 0 : i32
    return %arg0, %c0_i32, %c0_i32_0 : i32, i32, i32
  }
}

</mosaic_0001>

<llo_original>
// kernel: tpu_custom_call.1
$region0: #{tpu_custom_call.1}
  #allocation0 [shape = 'u32[]', space=smem, size = 0x4, offset = 0x4, fixed_abs, tag = 'smem constant byte address 0x4 - core index']
  #allocation1 [shape = 'u32[144,128]{1,0:T(1,128)}', space=vmem, size = 0x12000, scoped, tag = 'internal scratch']
  %s0 = inlined_call_operand.hbm [shape: bf16[8,32,32], index: 0, kind: input, shape index: {}]
  %s1 = inlined_call_operand.vmem [shape: bf16[32,16], index: 1, kind: input, shape index: {}]
  %s2 = inlined_call_operand.hbm [shape: f32[8,16,16], index: 2, kind: output, shape index: {}]
  %s3 = sld [smem:[#allocation0]]
  $region45: #{tpu_custom_call.1} parent=0
    _
  %s5 = ssub.s32 1, %s3
  %s6 = scalar_select 0, %s5, %s3
  $region1: #{tpu_custom_call.1} parent=0
    #allocation2 [shape = 'u8[65536]{0}', space=vmem, size = 0x10000, scoped, tag = 'input window, operand 0']
    #allocation3 [shape = 's32[2]{0}', space=sflag, size = 0x8, scoped, tag = 'scoped memory for tpu_custom_call.1']
    #allocation4 [shape = 's32[2]{0}', space=sflag, size = 0x8, scoped, tag = 'scoped memory for tpu_custom_call.1']
    #allocation5 [shape = 'u8[65536]{0}', space=vmem, size = 0x10000, scoped, tag = 'output window, operand 0']
    %7 = vsyncpa [#allocation3], 0
    %s8 = scalar_lea.sflag [#allocation3], 1
    %9 = vsyncpa %s8, 0
    %10 = vsyncpa [#allocation4], 0
    %s11 = scalar_lea.sflag [#allocation4], 1
    %12 = vsyncpa %s11, 0
    loop: start=0, step=1, limit=4
    $region2: #{tpu_custom_call.1} parent=1 // loop_pre_header
      _
    $region3: #{tpu_custom_call.1} parent=1 // loop_header
      %s14 = sphi 0, %s18
      %p15 = scmp.ge.s32.totalorder %s14, 4
      %s24 = sphi 0, %s26
      %s27 = sphi 0, %s24
      %s28 = sphi 0, %s27
      %s44 = sphi 0, %s28
      %s48 = sphi 0, %s48
      %s50 = sphi 0, %s48
      %s51 = sphi 0, %s50
      %s65 = sphi 0, %s51
      %s71 = sphi 0, %s73
      %s74 = sphi 0, %s71
      %s75 = sphi 0, %s74
      %s91 = sphi 0, %s75
    $region4: #{tpu_custom_call.1} parent=1 // loop_header_branch
      %17 = sbr.rel (%p15) target = $region8
    $region5: #{tpu_custom_call.1} parent=1 // loop_body
      %s19 = ssub.s32 %s14, 1
      %s20 = ssub.s32 %s14, 2
      %s21 = sadd.s32 %s14, 1
      %s22 = ssub.s32 %s14, %s21
      %p23 = scmp.eq.s32.totalorder %s22, 0
      %s25 = sadd.s32 %s24, 1
      %s26 = scalar_select %p23, %s24, %s25
      %p29 = pneg %p23
      %p30 = scmp.eq.s32.totalorder %s14, 1
      %p31 = por %p29, %p30
      %p32 = scmp.ne.s32.totalorder %s24, %s27
      %p33 = scmp.eq.s32.totalorder %s14, 0
      %p34 = por %p32, %p33
      %p35 = scmp.ne.s32.totalorder %s24, %s27
      %p36 = scmp.eq.s32.totalorder %s19, 1
      %p37 = por %p35, %p36
      %p38 = scmp.ne.s32.totalorder %s27, %s28
      %p39 = scmp.eq.s32.totalorder %s19, 0
      %p40 = por %p38, %p39
      %p41 = scmp.ne.s32.totalorder %s27, %s28
      %p42 = scmp.eq.s32.totalorder %s20, 1
      %p43 = por %p41, %p42
      %p45 = scmp.ne.s32.totalorder %s28, %s44
      %p46 = scmp.eq.s32.totalorder %s20, 0
      %p47 = por %p45, %p46
      %s49 = sadd.s32 %s48, 1
      %p52 = scmp.eq.s32.totalorder %s14, 1
      %p53 = scmp.ne.s32.totalorder %s48, %s50
      %p54 = scmp.eq.s32.totalorder %s14, 0
      %p55 = por %p53, %p54
      %p56 = scmp.ne.s32.totalorder %s48, %s50
      %p57 = scmp.eq.s32.totalorder %s19, 1
      %p58 = por %p56, %p57
      %p59 = scmp.ne.s32.totalorder %s50, %s51
      %p60 = scmp.eq.s32.totalorder %s19, 0
      %p61 = por %p59, %p60
      %p62 = scmp.ne.s32.totalorder %s50, %s51
      %p63 = scmp.eq.s32.totalorder %s20, 1
      %p64 = por %p62, %p63
      %p66 = scmp.ne.s32.totalorder %s51, %s65
      %p67 = scmp.eq.s32.totalorder %s20, 0
      %p68 = por %p66, %p67
      %s69 = ssub.s32 %s14, %s21
      %p70 = scmp.eq.s32.totalorder %s69, 0
      %s72 = sadd.s32 %s71, 1
      %s73 = scalar_select %p70, %s71, %s72
      %p76 = pneg %p70
      %p77 = scmp.eq.s32.totalorder %s14, 1
      %p78 = por %p76, %p77
      %p79 = scmp.ne.s32.totalorder %s71, %s74
      %p80 = scmp.eq.s32.totalorder %s14, 0
      %p81 = por %p79, %p80
      %p82 = scmp.ne.s32.totalorder %s71, %s74
      %p83 = scmp.eq.s32.totalorder %s19, 1
      %p84 = por %p82, %p83
      %p85 = scmp.ne.s32.totalorder %s74, %s75
      %p86 = scmp.eq.s32.totalorder %s19, 0
      %p87 = por %p85, %p86
      %p88 = scmp.ne.s32.totalorder %s74, %s75
      %p89 = scmp.eq.s32.totalorder %s20, 1
      %p90 = por %p88, %p89
      %p92 = scmp.ne.s32.totalorder %s75, %s91
      %p93 = scmp.eq.s32.totalorder %s20, 0
      %p94 = por %p92, %p93
      %p95 = scmp.le.s32.totalorder 1, %s14
      %p96 = scmp.lt.s32.totalorder %s14, 3
      %p97 = pnand %p95, %p96
      %p98 = pneg %p97
      // Predicated region
      $region9: #{tpu_custom_call.1} parent=5 // pred_check
        _
      $region10: #{tpu_custom_call.1} parent=5 // pred_check_branch
        %100 = sbr.rel (%p97) target = $region12
      $region11: #{tpu_custom_call.1} parent=5 // pred_region
        %s101 = ssub.s32 %s14, 1
        // Predicated region
        $region13: #{tpu_custom_call.1} parent=11 // pred_check
          %p102 = pneg %p61
        $region14: #{tpu_custom_call.1} parent=11 // pred_check_branch
          %104 = sbr.rel (%p102) target = $region16
        $region15: #{tpu_custom_call.1} parent=11 // pred_region
          _
        $region16: #{tpu_custom_call.1} parent=11 // pred_fallthru
          _
      $region12: #{tpu_custom_call.1} parent=5 // pred_fallthru
        _
      %p105 = scmp.lt.s32.totalorder %s14, 2
      // Predicated region
      $region17: #{tpu_custom_call.1} parent=5 // pred_check
        %p106 = pneg %p105
      $region18: #{tpu_custom_call.1} parent=5 // pred_check_branch
        %108 = sbr.rel (%p106) target = $region20
      $region19: #{tpu_custom_call.1} parent=5 // pred_region
        // Predicated region
        $region21: #{tpu_custom_call.1} parent=19 // pred_check
          %p109 = pneg %p34
        $region22: #{tpu_custom_call.1} parent=19 // pred_check_branch
          %111 = sbr.rel (%p109) target = $region24
        $region23: #{tpu_custom_call.1} parent=19 // pred_region
          %s112 = sand.u32 %s24, 1
          %s113 = scalar_lea.sflag [#allocation3], %s112
          %s114 = sand.u32 %s24, 1
          %s115 = smul.addr %s114, 64
          %s116 = scalar_lea.vmem [#allocation2], %s115
          %s117 = smul.u32 4, %s14
          %s119 = ssub.s32 1024, 1024
          %120 = vsyncadd %s113, %s119
          %s121 = smul.addr %s117, 4
          %s122 = smul.addr %s121, 64
          %s123 = scalar_lea.hbm %s0, %s122
          %s124 = sshll.u32 %s116, 4
          %s125 = int_to_ptr.vmem [resolvable:$true] %s124
          %130 = dma.hbm_to_vmem [thread:$0]  %s123, 1024, %s125, %s113, 64, 64, 4
        $region24: #{tpu_custom_call.1} parent=19 // pred_fallthru
          _
      $region20: #{tpu_custom_call.1} parent=5 // pred_fallthru
        _
      %p131 = scmp.le.s32.totalorder 1, %s14
      %p132 = scmp.lt.s32.totalorder %s14, 3
      %p133 = pnand %p131, %p132
      %p134 = pneg %p133
      // Predicated region
      $region25: #{tpu_custom_call.1} parent=5 // pred_check
        _
      $region26: #{tpu_custom_call.1} parent=5 // pred_check_branch
        %136 = sbr.rel (%p133) target = $region28
      $region27: #{tpu_custom_call.1} parent=5 // pred_region
        %s137 = ssub.s32 %s14, 1
        %s138 = sand.u32 %s27, 1
        %s139 = scalar_lea.sflag [#allocation3], %s138
        %s140 = sand.u32 %s27, 1
        %s141 = smul.addr %s140, 64
        %s142 = scalar_lea.vmem [#allocation2], %s141
        // Predicated region
        $region29: #{tpu_custom_call.1} parent=27 // pred_check
          %p143 = pneg %p40
        $region30: #{tpu_custom_call.1} parent=27 // pred_check_branch
          %145 = sbr.rel (%p143) target = $region32
        $region31: #{tpu_custom_call.1} parent=27 // pred_region
          %146 = dma.done %s139, 1024
        $region32: #{tpu_custom_call.1} parent=27 // pred_fallthru
          _
        %s147 = sand.u32 %s27, 1
        %s148 = scalar_lea.sflag [#allocation3], %s147
        %s149 = sand.u32 %s27, 1
        %s150 = smul.addr %s149, 64
        %s151 = scalar_lea.vmem [#allocation2], %s150
        %p152 = pneg %p40
        %p153 = pneg %p37
        %p154 = pneg %p61
        %p155 = pneg %p58
        %p156 = pneg %p87
        %p157 = pneg %p84
        %s158 = sand.u32 %s74, 1
        %s159 = scalar_lea.sflag [#allocation4], %s158
        %s160 = sand.u32 %s74, 1
        %s161 = smul.addr %s160, 64
        %s162 = scalar_lea.vmem [#allocation5], %s161
        %s163 = smul.u32 4, %s19
        %s164 = smul.u32 4, %s19
        %v166 = vld [vmem:[%s1] sm:$0xf]
        %v167 = vld [vmem:[%s1 + $0x4] sm:$0xf]
        %v168 = vld [vmem:[%s1 + $0x8] sm:$0xf]
        %v169 = vld [vmem:[%s1 + $0xc] sm:$0xf]
        %v170 = vld [vmem:[%s142] sm:$0xf]
        %v171 = vld [vmem:[%s142 + $0x4] sm:$0xf]
        %v172 = vld [vmem:[%s142 + $0x8] sm:$0xf]
        %v173 = vld [vmem:[%s142 + $0xc] sm:$0xf]
        %v174 = vld [vmem:[%s142 + $0x10] sm:$0xf]
        %v175 = vld [vmem:[%s142 + $0x14] sm:$0xf]
        %v176 = vld [vmem:[%s142 + $0x18] sm:$0xf]
        %v177 = vld [vmem:[%s142 + $0x1c] sm:$0xf]
        %v178 = vld [vmem:[%s142 + $0x20] sm:$0xf]
        %v179 = vld [vmem:[%s142 + $0x24] sm:$0xf]
        %v180 = vld [vmem:[%s142 + $0x28] sm:$0xf]
        %v181 = vld [vmem:[%s142 + $0x2c] sm:$0xf]
        %v182 = vld [vmem:[%s142 + $0x30] sm:$0xf]
        %v183 = vld [vmem:[%s142 + $0x34] sm:$0xf]
        %v184 = vld [vmem:[%s142 + $0x38] sm:$0xf]
        %v185 = vld [vmem:[%s142 + $0x3c] sm:$0xf]
        %v202 = vunpack.c.l.b16 %v170
        %v203 = vunpack.c.l.b16 %v171
        %v204 = vunpack.c.l.b16 %v172
        %v205 = vunpack.c.l.b16 %v173
        %v206 = vunpack.c.l.b16 %v174
        %v207 = vunpack.c.l.b16 %v175
        %v208 = vunpack.c.l.b16 %v176
        %v209 = vunpack.c.l.b16 %v177
        %v210 = vunpack.c.l.b16 %v178
        %v211 = vunpack.c.l.b16 %v179
        %v212 = vunpack.c.l.b16 %v180
        %v213 = vunpack.c.l.b16 %v181
        %v214 = vunpack.c.l.b16 %v182
        %v215 = vunpack.c.l.b16 %v183
        %v216 = vunpack.c.l.b16 %v184
        %v217 = vunpack.c.l.b16 %v185
        %v218 = vpack.c.b16 %v203, %v202
        %v219 = vpack.c.b16 %v205, %v204
        %v220 = vpack.c.b16 %v207, %v206
        %v221 = vpack.c.b16 %v209, %v208
        %v222 = vpack.c.b16 %v211, %v210
        %v223 = vpack.c.b16 %v213, %v212
        %v224 = vpack.c.b16 %v215, %v214
        %v225 = vpack.c.b16 %v217, %v216
        %v230 = vunpack.c.l.b16 %v166
        %v231 = vunpack.c.l.b16 %v167
        %v232 = vunpack.c.l.b16 %v168
        %v233 = vunpack.c.l.b16 %v169
        %v234 = vpack.c.b16 %v231, %v230
        %v235 = vpack.c.b16 %v233, %v232
        %vm238 = vcmask 261120
        %v240 = vsel %vm238, %v218, 0
        %v243 = vsel %vm238, %v219, 0
        %v246 = vsel %vm238, %v220, 0
        %v249 = vsel %vm238, %v221, 0
        %v252 = vsel %vm238, %v222, 0
        %v255 = vsel %vm238, %v223, 0
        %v258 = vsel %vm238, %v224, 0
        %v261 = vsel %vm238, %v225, 0
        %263 = vmatprep.subr.bf16.mxu0 0
        %264 = vmatpush1.bf16.msra.mxu0 %v234
        %265 = vmatprep.subr.bf16.mxu0 0
        %266 = vmatpush1.bf16.msra.mxu0 %v235
        %267 = vmatprep.subr.bf16.mxu0 0
        %268 = vmatpush1.bf16.msra.mxu0 0
        %269 = vmatprep.subr.bf16.mxu0 0
        %270 = vmatpush1.bf16.msra.mxu0 0
        %271 = vmatprep.subr.bf16.mxu0 0
        %272 = vmatpush1.bf16.msra.mxu0 0
        %273 = vmatprep.subr.bf16.mxu0 0
        %274 = vmatpush1.bf16.msra.mxu0 0
        %275 = vmatprep.subr.bf16.mxu0 0
        %276 = vmatpush1.bf16.msra.mxu0 0
        %277 = vmatprep.subr.bf16.mxu0 0
        %278 = vmatpush1.bf16.msra.mxu0 0
        %279 = vmatprep.subr.bf16.mxu0 0
        %280 = vmatpush1.bf16.msra.mxu0 0
        %281 = vmatprep.subr.bf16.mxu0 0
        %282 = vmatpush1.bf16.msra.mxu0 0
        %283 = vmatprep.subr.bf16.mxu0 0
        %284 = vmatpush1.bf16.msra.mxu0 0
        %285 = vmatprep.subr.bf16.mxu0 0
        %286 = vmatpush1.bf16.msra.mxu0 0
        %287 = vmatprep.subr.bf16.mxu0 0
        %288 = vmatpush1.bf16.msra.mxu0 0
        %289 = vmatprep.subr.bf16.mxu0 0
        %290 = vmatpush1.bf16.msra.mxu0 0
        %291 = vmatprep.subr.bf16.mxu0 0
        %292 = vmatpush1.bf16.msra.mxu0 0
        %293 = vmatprep.subr.bf16.mxu0 0
        %294 = vmatpush1.bf16.msra.mxu0 0
        %295 = vmatprep.mubr.bf16.mxu0 0
        %296 = vmatmul.mubr.bf16.gmra.mrb[0].mxu0 %v240
        %v297 = vpop.f32.mrb[0].mxu0
        %v298 = vadd.f32 0.0, %v297
        %v299 = vpop.f32.mrb[0].mxu0
        %v300 = vpop.f32.mrb[0].mxu0
        %v301 = vadd.f32 0.0, %v300
        %v302 = vpop.f32.mrb[0].mxu0
        %303 = vmatprep.mubr.bf16.mxu0 0
        %304 = vmatmul.mubr.bf16.gmra.mrb[0].mxu0 %v243
        %v305 = vpop.f32.mrb[0].mxu0
        %v306 = vadd.f32 0.0, %v305
        %v307 = vpop.f32.mrb[0].mxu0
        %v308 = vpop.f32.mrb[0].mxu0
        %v309 = vadd.f32 0.0, %v308
        %v310 = vpop.f32.mrb[0].mxu0
        %311 = vmatprep.mubr.bf16.mxu0 0
        %312 = vmatmul.mubr.bf16.gmra.mrb[0].mxu0 %v246
        %v313 = vpop.f32.mrb[0].mxu0
        %v314 = vadd.f32 0.0, %v313
        %v315 = vpop.f32.mrb[0].mxu0
        %v316 = vpop.f32.mrb[0].mxu0
        %v317 = vadd.f32 0.0, %v316
        %v318 = vpop.f32.mrb[0].mxu0
        %319 = vmatprep.mubr.bf16.mxu0 0
        %320 = vmatmul.mubr.bf16.gmra.mrb[0].mxu0 %v249
        %v321 = vpop.f32.mrb[0].mxu0
        %v322 = vadd.f32 0.0, %v321
        %v323 = vpop.f32.mrb[0].mxu0
        %v324 = vpop.f32.mrb[0].mxu0
        %v325 = vadd.f32 0.0, %v324
        %v326 = vpop.f32.mrb[0].mxu0
        %327 = vmatprep.mubr.bf16.mxu0 0
        %328 = vmatmul.mubr.bf16.gmra.mrb[0].mxu0 %v252
        %v329 = vpop.f32.mrb[0].mxu0
        %v330 = vadd.f32 0.0, %v329
        %v331 = vpop.f32.mrb[0].mxu0
        %v332 = vpop.f32.mrb[0].mxu0
        %v333 = vadd.f32 0.0, %v332
        %v334 = vpop.f32.mrb[0].mxu0
        %335 = vmatprep.mubr.bf16.mxu0 0
        %336 = vmatmul.mubr.bf16.gmra.mrb[0].mxu0 %v255
        %v337 = vpop.f32.mrb[0].mxu0
        %v338 = vadd.f32 0.0, %v337
        %v339 = vpop.f32.mrb[0].mxu0
        %v340 = vpop.f32.mrb[0].mxu0
        %v341 = vadd.f32 0.0, %v340
        %v342 = vpop.f32.mrb[0].mxu0
        %343 = vmatprep.mubr.bf16.mxu0 0
        %344 = vmatmul.mubr.bf16.gmra.mrb[0].mxu0 %v258
        %v345 = vpop.f32.mrb[0].mxu0
        %v346 = vadd.f32 0.0, %v345
        %v347 = vpop.f32.mrb[0].mxu0
        %v348 = vpop.f32.mrb[0].mxu0
        %v349 = vadd.f32 0.0, %v348
        %v350 = vpop.f32.mrb[0].mxu0
        %351 = vmatprep.mubr.bf16.mxu0 0
        %352 = vmatmul.mubr.bf16.gmra.mrb[0].mxu0 %v261
        %v353 = vpop.f32.mrb[0].mxu0
        %v354 = vadd.f32 0.0, %v353
        %v355 = vpop.f32.mrb[0].mxu0
        %v356 = vpop.f32.mrb[0].mxu0
        %v357 = vadd.f32 0.0, %v356
        %v358 = vpop.f32.mrb[0].mxu0
        %359 = vdwg.mxu0
        %360 = vxpose.xlu0.b32.start [1/16] %v298, 128
        %361 = vxpose.xlu0.b32.cont [2/16] %v301, 128
        %362 = vxpose.xlu0.b32.cont [3/16] %v306, 128
        %363 = vxpose.xlu0.b32.cont [4/16] %v309, 128
        %364 = vxpose.xlu0.b32.cont [5/16] 0.0, 128
        %365 = vxpose.xlu0.b32.cont [6/16] 0.0, 128
        %366 = vxpose.xlu0.b32.cont [7/16] 0.0, 128
        %367 = vxpose.xlu0.b32.cont [8/16] 0.0, 128
        %368 = vxpose.xlu0.b32.cont [9/16] 0.0, 128
        %369 = vxpose.xlu0.b32.cont [10/16] 0.0, 128
        %370 = vxpose.xlu0.b32.cont [11/16] 0.0, 128
        %371 = vxpose.xlu0.b32.cont [12/16] 0.0, 128
        %372 = vxpose.xlu0.b32.cont [13/16] 0.0, 128
        %373 = vxpose.xlu0.b32.cont [14/16] 0.0, 128
        %374 = vxpose.xlu0.b32.cont [15/16] 0.0, 128
        %375 = vxpose.xlu0.b32.end [16/16] 0.0, 128
        %v376 = vpop.trf.xlu0
        %v377 = vpop.trf.xlu0
        %v378 = vpop.trf.xlu0
        %v379 = vpop.trf.xlu0
        %v380 = vpop.trf.xlu0
        %v381 = vpop.trf.xlu0
        %v382 = vpop.trf.xlu0
        %v383 = vpop.trf.xlu0
        %v384 = vpop.trf.xlu0
        %v385 = vpop.trf.xlu0
        %v386 = vpop.trf.xlu0
        %v387 = vpop.trf.xlu0
        %v388 = vpop.trf.xlu0
        %v389 = vpop.trf.xlu0
        %v390 = vpop.trf.xlu0
        %v391 = vpop.trf.xlu0
        %392 = vxpose.xlu0.b32.start [1/16] %v314, 128
        %393 = vxpose.xlu0.b32.cont [2/16] %v317, 128
        %394 = vxpose.xlu0.b32.cont [3/16] %v322, 128
        %395 = vxpose.xlu0.b32.cont [4/16] %v325, 128
        %396 = vxpose.xlu0.b32.cont [5/16] 0.0, 128
        %397 = vxpose.xlu0.b32.cont [6/16] 0.0, 128
        %398 = vxpose.xlu0.b32.cont [7/16] 0.0, 128
        %399 = vxpose.xlu0.b32.cont [8/16] 0.0, 128
        %400 = vxpose.xlu0.b32.cont [9/16] 0.0, 128
        %401 = vxpose.xlu0.b32.cont [10/16] 0.0, 128
        %402 = vxpose.xlu0.b32.cont [11/16] 0.0, 128
        %403 = vxpose.xlu0.b32.cont [12/16] 0.0, 128
        %404 = vxpose.xlu0.b32.cont [13/16] 0.0, 128
        %405 = vxpose.xlu0.b32.cont [14/16] 0.0, 128
        %406 = vxpose.xlu0.b32.cont [15/16] 0.0, 128
        %407 = vxpose.xlu0.b32.end [16/16] 0.0, 128
        %v408 = vpop.trf.xlu0
        %v409 = vpop.trf.xlu0
        %v410 = vpop.trf.xlu0
        %v411 = vpop.trf.xlu0
        %v412 = vpop.trf.xlu0
        %v413 = vpop.trf.xlu0
        %v414 = vpop.trf.xlu0
        %v415 = vpop.trf.xlu0
        %v416 = vpop.trf.xlu0
        %v417 = vpop.trf.xlu0
        %v418 = vpop.trf.xlu0
        %v419 = vpop.trf.xlu0
        %v420 = vpop.trf.xlu0
        %v421 = vpop.trf.xlu0
        %v422 = vpop.trf.xlu0
        %v423 = vpop.trf.xlu0
        %424 = vxpose.xlu0.b32.start [1/16] %v330, 128
        %425 = vxpose.xlu0.b32.cont [2/16] %v333, 128
        %426 = vxpose.xlu0.b32.cont [3/16] %v338, 128
        %427 = vxpose.xlu0.b32.cont [4/16] %v341, 128
        %428 = vxpose.xlu0.b32.cont [5/16] 0.0, 128
        %429 = vxpose.xlu0.b32.cont [6/16] 0.0, 128
        %430 = vxpose.xlu0.b32.cont [7/16] 0.0, 128
        %431 = vxpose.xlu0.b32.cont [8/16] 0.0, 128
        %432 = vxpose.xlu0.b32.cont [9/16] 0.0, 128
        %433 = vxpose.xlu0.b32.cont [10/16] 0.0, 128
        %434 = vxpose.xlu0.b32.cont [11/16] 0.0, 128
        %435 = vxpose.xlu0.b32.cont [12/16] 0.0, 128
        %436 = vxpose.xlu0.b32.cont [13/16] 0.0, 128
        %437 = vxpose.xlu0.b32.cont [14/16] 0.0, 128
        %438 = vxpose.xlu0.b32.cont [15/16] 0.0, 128
        %439 = vxpose.xlu0.b32.end [16/16] 0.0, 128
        %v440 = vpop.trf.xlu0
        %v441 = vpop.trf.xlu0
        %v442 = vpop.trf.xlu0
        %v443 = vpop.trf.xlu0
        %v444 = vpop.trf.xlu0
        %v445 = vpop.trf.xlu0
        %v446 = vpop.trf.xlu0
        %v447 = vpop.trf.xlu0
        %v448 = vpop.trf.xlu0
        %v449 = vpop.trf.xlu0
        %v450 = vpop.trf.xlu0
        %v451 = vpop.trf.xlu0
        %v452 = vpop.trf.xlu0
        %v453 = vpop.trf.xlu0
        %v454 = vpop.trf.xlu0
        %v455 = vpop.trf.xlu0
        %456 = vxpose.xlu0.b32.start [1/16] %v346, 128
        %457 = vxpose.xlu0.b32.cont [2/16] %v349, 128
        %458 = vxpose.xlu0.b32.cont [3/16] %v354, 128
        %459 = vxpose.xlu0.b32.cont [4/16] %v357, 128
        %460 = vxpose.xlu0.b32.cont [5/16] 0.0, 128
        %461 = vxpose.xlu0.b32.cont [6/16] 0.0, 128
        %462 = vxpose.xlu0.b32.cont [7/16] 0.0, 128
        %463 = vxpose.xlu0.b32.cont [8/16] 0.0, 128
        %464 = vxpose.xlu0.b32.cont [9/16] 0.0, 128
        %465 = vxpose.xlu0.b32.cont [10/16] 0.0, 128
        %466 = vxpose.xlu0.b32.cont [11/16] 0.0, 128
        %467 = vxpose.xlu0.b32.cont [12/16] 0.0, 128
        %468 = vxpose.xlu0.b32.cont [13/16] 0.0, 128
        %469 = vxpose.xlu0.b32.cont [14/16] 0.0, 128
        %470 = vxpose.xlu0.b32.cont [15/16] 0.0, 128
        %471 = vxpose.xlu0.b32.end [16/16] 0.0, 128
        %v472 = vpop.trf.xlu0
        %v473 = vpop.trf.xlu0
        %v474 = vpop.trf.xlu0
        %v475 = vpop.trf.xlu0
        %v476 = vpop.trf.xlu0
        %v477 = vpop.trf.xlu0
        %v478 = vpop.trf.xlu0
        %v479 = vpop.trf.xlu0
        %v480 = vpop.trf.xlu0
        %v481 = vpop.trf.xlu0
        %v482 = vpop.trf.xlu0
        %v483 = vpop.trf.xlu0
        %v484 = vpop.trf.xlu0
        %v485 = vpop.trf.xlu0
        %v486 = vpop.trf.xlu0
        %v487 = vpop.trf.xlu0
        %v488 = vpack.c.bf16 %v377, %v376
        %v489 = vpack.c.bf16 %v409, %v408
        %v490 = vpack.c.bf16 %v441, %v440
        %v491 = vpack.c.bf16 %v473, %v472
        %v493 = vsel %vm238, %v488, 0
        %v496 = vsel %vm238, %v489, 0
        %v499 = vsel %vm238, %v490, 0
        %v502 = vsel %vm238, %v491, 0
        %504 = vmatprep.subr.bf16.mxu0 0
        %505 = vmatpush1.bf16.msra.mxu0 %v234
        %506 = vmatprep.subr.bf16.mxu0 0
        %507 = vmatpush1.bf16.msra.mxu0 %v235
        %508 = vmatprep.subr.bf16.mxu0 0
        %509 = vmatpush1.bf16.msra.mxu0 0
        %510 = vmatprep.subr.bf16.mxu0 0
        %511 = vmatpush1.bf16.msra.mxu0 0
        %512 = vmatprep.subr.bf16.mxu0 0
        %513 = vmatpush1.bf16.msra.mxu0 0
        %514 = vmatprep.subr.bf16.mxu0 0
        %515 = vmatpush1.bf16.msra.mxu0 0
        %516 = vmatprep.subr.bf16.mxu0 0
        %517 = vmatpush1.bf16.msra.mxu0 0
        %518 = vmatprep.subr.bf16.mxu0 0
        %519 = vmatpush1.bf16.msra.mxu0 0
        %520 = vmatprep.subr.bf16.mxu0 0
        %521 = vmatpush1.bf16.msra.mxu0 0
        %522 = vmatprep.subr.bf16.mxu0 0
        %523 = vmatpush1.bf16.msra.mxu0 0
        %524 = vmatprep.subr.bf16.mxu0 0
        %525 = vmatpush1.bf16.msra.mxu0 0
        %526 = vmatprep.subr.bf16.mxu0 0
        %527 = vmatpush1.bf16.msra.mxu0 0
        %528 = vmatprep.subr.bf16.mxu0 0
        %529 = vmatpush1.bf16.msra.mxu0 0
        %530 = vmatprep.subr.bf16.mxu0 0
        %531 = vmatpush1.bf16.msra.mxu0 0
        %532 = vmatprep.subr.bf16.mxu0 0
        %533 = vmatpush1.bf16.msra.mxu0 0
        %534 = vmatprep.subr.bf16.mxu0 0
        %535 = vmatpush1.bf16.msra.mxu0 0
        %536 = vmatprep.mubr.bf16.mxu0 0
        %537 = vmatmul.mubr.bf16.gmra.mrb[0].mxu0 %v493
        %v538 = vpop.f32.mrb[0].mxu0
        %v539 = vadd.f32 0.0, %v538
        %v540 = vpop.f32.mrb[0].mxu0
        %v541 = vpop.f32.mrb[0].mxu0
        %v542 = vadd.f32 0.0, %v541
        %v543 = vpop.f32.mrb[0].mxu0
        %544 = vmatprep.mubr.bf16.mxu0 0
        %545 = vmatmul.mubr.bf16.gmra.mrb[0].mxu0 %v496
        %v546 = vpop.f32.mrb[0].mxu0
        %v547 = vadd.f32 0.0, %v546
        %v548 = vpop.f32.mrb[0].mxu0
        %v549 = vpop.f32.mrb[0].mxu0
        %v550 = vadd.f32 0.0, %v549
        %v551 = vpop.f32.mrb[0].mxu0
        %552 = vmatprep.mubr.bf16.mxu0 0
        %553 = vmatmul.mubr.bf16.gmra.mrb[0].mxu0 %v499
        %v554 = vpop.f32.mrb[0].mxu0
        %v555 = vadd.f32 0.0, %v554
        %v556 = vpop.f32.mrb[0].mxu0
        %v557 = vpop.f32.mrb[0].mxu0
        %v558 = vadd.f32 0.0, %v557
        %v559 = vpop.f32.mrb[0].mxu0
        %560 = vmatprep.mubr.bf16.mxu0 0
        %561 = vmatmul.mubr.bf16.gmra.mrb[0].mxu0 %v502
        %v562 = vpop.f32.mrb[0].mxu0
        %v563 = vadd.f32 0.0, %v562
        %v564 = vpop.f32.mrb[0].mxu0
        %v565 = vpop.f32.mrb[0].mxu0
        %v566 = vadd.f32 0.0, %v565
        %v567 = vpop.f32.mrb[0].mxu0
        %568 = vdwg.mxu0
        %569 = vxpose.xlu0.b32.start [1/16] %v539, 128
        %570 = vxpose.xlu0.b32.cont [2/16] %v542, 128
        %571 = vxpose.xlu0.b32.cont [3/16] 0.0, 128
        %572 = vxpose.xlu0.b32.cont [4/16] 0.0, 128
        %573 = vxpose.xlu0.b32.cont [5/16] 0.0, 128
        %574 = vxpose.xlu0.b32.cont [6/16] 0.0, 128
        %575 = vxpose.xlu0.b32.cont [7/16] 0.0, 128
        %576 = vxpose.xlu0.b32.cont [8/16] 0.0, 128
        %577 = vxpose.xlu0.b32.cont [9/16] 0.0, 128
        %578 = vxpose.xlu0.b32.cont [10/16] 0.0, 128
        %579 = vxpose.xlu0.b32.cont [11/16] 0.0, 128
        %580 = vxpose.xlu0.b32.cont [12/16] 0.0, 128
        %581 = vxpose.xlu0.b32.cont [13/16] 0.0, 128
        %582 = vxpose.xlu0.b32.cont [14/16] 0.0, 128
        %583 = vxpose.xlu0.b32.cont [15/16] 0.0, 128
        %584 = vxpose.xlu0.b32.end [16/16] 0.0, 128
        %v585 = vpop.trf.xlu0
        %v586 = vpop.trf.xlu0
        %v587 = vpop.trf.xlu0
        %v588 = vpop.trf.xlu0
        %v589 = vpop.trf.xlu0
        %v590 = vpop.trf.xlu0
        %v591 = vpop.trf.xlu0
        %v592 = vpop.trf.xlu0
        %v593 = vpop.trf.xlu0
        %v594 = vpop.trf.xlu0
        %v595 = vpop.trf.xlu0
        %v596 = vpop.trf.xlu0
        %v597 = vpop.trf.xlu0
        %v598 = vpop.trf.xlu0
        %v599 = vpop.trf.xlu0
        %v600 = vpop.trf.xlu0
        %601 = vxpose.xlu0.b32.start [1/16] %v547, 128
        %602 = vxpose.xlu0.b32.cont [2/16] %v550, 128
        %603 = vxpose.xlu0.b32.cont [3/16] 0.0, 128
        %604 = vxpose.xlu0.b32.cont [4/16] 0.0, 128
        %605 = vxpose.xlu0.b32.cont [5/16] 0.0, 128
        %606 = vxpose.xlu0.b32.cont [6/16] 0.0, 128
        %607 = vxpose.xlu0.b32.cont [7/16] 0.0, 128
        %608 = vxpose.xlu0.b32.cont [8/16] 0.0, 128
        %609 = vxpose.xlu0.b32.cont [9/16] 0.0, 128
        %610 = vxpose.xlu0.b32.cont [10/16] 0.0, 128
        %611 = vxpose.xlu0.b32.cont [11/16] 0.0, 128
        %612 = vxpose.xlu0.b32.cont [12/16] 0.0, 128
        %613 = vxpose.xlu0.b32.cont [13/16] 0.0, 128
        %614 = vxpose.xlu0.b32.cont [14/16] 0.0, 128
        %615 = vxpose.xlu0.b32.cont [15/16] 0.0, 128
        %616 = vxpose.xlu0.b32.end [16/16] 0.0, 128
        %v617 = vpop.trf.xlu0
        %v618 = vpop.trf.xlu0
        %v619 = vpop.trf.xlu0
        %v620 = vpop.trf.xlu0
        %v621 = vpop.trf.xlu0
        %v622 = vpop.trf.xlu0
        %v623 = vpop.trf.xlu0
        %v624 = vpop.trf.xlu0
        %v625 = vpop.trf.xlu0
        %v626 = vpop.trf.xlu0
        %v627 = vpop.trf.xlu0
        %v628 = vpop.trf.xlu0
        %v629 = vpop.trf.xlu0
        %v630 = vpop.trf.xlu0
        %v631 = vpop.trf.xlu0
        %v632 = vpop.trf.xlu0
        %633 = vxpose.xlu0.b32.start [1/16] %v555, 128
        %634 = vxpose.xlu0.b32.cont [2/16] %v558, 128
        %635 = vxpose.xlu0.b32.cont [3/16] 0.0, 128
        %636 = vxpose.xlu0.b32.cont [4/16] 0.0, 128
        %637 = vxpose.xlu0.b32.cont [5/16] 0.0, 128
        %638 = vxpose.xlu0.b32.cont [6/16] 0.0, 128
        %639 = vxpose.xlu0.b32.cont [7/16] 0.0, 128
        %640 = vxpose.xlu0.b32.cont [8/16] 0.0, 128
        %641 = vxpose.xlu0.b32.cont [9/16] 0.0, 128
        %642 = vxpose.xlu0.b32.cont [10/16] 0.0, 128
        %643 = vxpose.xlu0.b32.cont [11/16] 0.0, 128
        %644 = vxpose.xlu0.b32.cont [12/16] 0.0, 128
        %645 = vxpose.xlu0.b32.cont [13/16] 0.0, 128
        %646 = vxpose.xlu0.b32.cont [14/16] 0.0, 128
        %647 = vxpose.xlu0.b32.cont [15/16] 0.0, 128
        %648 = vxpose.xlu0.b32.end [16/16] 0.0, 128
        %v649 = vpop.trf.xlu0
        %v650 = vpop.trf.xlu0
        %v651 = vpop.trf.xlu0
        %v652 = vpop.trf.xlu0
        %v653 = vpop.trf.xlu0
        %v654 = vpop.trf.xlu0
        %v655 = vpop.trf.xlu0
        %v656 = vpop.trf.xlu0
        %v657 = vpop.trf.xlu0
        %v658 = vpop.trf.xlu0
        %v659 = vpop.trf.xlu0
        %v660 = vpop.trf.xlu0
        %v661 = vpop.trf.xlu0
        %v662 = vpop.trf.xlu0
        %v663 = vpop.trf.xlu0
        %v664 = vpop.trf.xlu0
        %665 = vxpose.xlu0.b32.start [1/16] %v563, 128
        %666 = vxpose.xlu0.b32.cont [2/16] %v566, 128
        %667 = vxpose.xlu0.b32.cont [3/16] 0.0, 128
        %668 = vxpose.xlu0.b32.cont [4/16] 0.0, 128
        %669 = vxpose.xlu0.b32.cont [5/16] 0.0, 128
        %670 = vxpose.xlu0.b32.cont [6/16] 0.0, 128
        %671 = vxpose.xlu0.b32.cont [7/16] 0.0, 128
        %672 = vxpose.xlu0.b32.cont [8/16] 0.0, 128
        %673 = vxpose.xlu0.b32.cont [9/16] 0.0, 128
        %674 = vxpose.xlu0.b32.cont [10/16] 0.0, 128
        %675 = vxpose.xlu0.b32.cont [11/16] 0.0, 128
        %676 = vxpose.xlu0.b32.cont [12/16] 0.0, 128
        %677 = vxpose.xlu0.b32.cont [13/16] 0.0, 128
        %678 = vxpose.xlu0.b32.cont [14/16] 0.0, 128
        %679 = vxpose.xlu0.b32.cont [15/16] 0.0, 128
        %680 = vxpose.xlu0.b32.end [16/16] 0.0, 128
        %v681 = vpop.trf.xlu0
        %v682 = vpop.trf.xlu0
        %v683 = vpop.trf.xlu0
        %v684 = vpop.trf.xlu0
        %v685 = vpop.trf.xlu0
        %v686 = vpop.trf.xlu0
        %v687 = vpop.trf.xlu0
        %v688 = vpop.trf.xlu0
        %v689 = vpop.trf.xlu0
        %v690 = vpop.trf.xlu0
        %v691 = vpop.trf.xlu0
        %v692 = vpop.trf.xlu0
        %v693 = vpop.trf.xlu0
        %v694 = vpop.trf.xlu0
        %v695 = vpop.trf.xlu0
        %v696 = vpop.trf.xlu0
        %vm697 = vcmask 130048
        %698 = vst.msk [vmem:[%s162] sm:$0xff] %vm697, %v585
        %699 = vst.msk [vmem:[%s162 + $0x8] sm:$0xff] %vm697, %v586
        %700 = vst.msk [vmem:[%s162 + $0x10] sm:$0xff] %vm697, %v617
        %701 = vst.msk [vmem:[%s162 + $0x18] sm:$0xff] %vm697, %v618
        %702 = vst.msk [vmem:[%s162 + $0x20] sm:$0xff] %vm697, %v649
        %703 = vst.msk [vmem:[%s162 + $0x28] sm:$0xff] %vm697, %v650
        %704 = vst.msk [vmem:[%s162 + $0x30] sm:$0xff] %vm697, %v681
        %705 = vst.msk [vmem:[%s162 + $0x38] sm:$0xff] %vm697, %v682
        %s706 = sand.u32 %s74, 1
        %s707 = scalar_lea.sflag [#allocation4], %s706
        %s708 = sand.u32 %s74, 1
        %s709 = smul.addr %s708, 64
        %s710 = scalar_lea.vmem [#allocation5], %s709
        // Predicated region
        $region33: #{tpu_custom_call.1} parent=27 // pred_check
          %p711 = pneg %p84
        $region34: #{tpu_custom_call.1} parent=27 // pred_check_branch
          %713 = sbr.rel (%p711) target = $region36
        $region35: #{tpu_custom_call.1} parent=27 // pred_region
          %s714 = smul.u32 4, %s19
          %s716 = ssub.s32 1024, 1024
          %717 = vsyncadd %s707, %s716
          %s718 = smul.addr %s714, 2
          %s719 = smul.addr %s718, 128
          %s720 = scalar_lea.hbm %s2, %s719
          %s721 = sshll.u32 %s710, 4
          %s722 = int_to_ptr.vmem [resolvable:$true] %s721
          %727 = dma.vmem_to_hbm [thread:$0]  %s722, 1024, %s720, %s707, 128, 128, 8
        $region36: #{tpu_custom_call.1} parent=27 // pred_fallthru
          _
      $region28: #{tpu_custom_call.1} parent=5 // pred_fallthru
        _
      %p728 = scmp.le.s32.totalorder 2, %s14
      // Predicated region
      $region37: #{tpu_custom_call.1} parent=5 // pred_check
        %p729 = pneg %p728
      $region38: #{tpu_custom_call.1} parent=5 // pred_check_branch
        %731 = sbr.rel (%p729) target = $region40
      $region39: #{tpu_custom_call.1} parent=5 // pred_region
        %s732 = ssub.s32 %s14, 2
        // Predicated region
        $region41: #{tpu_custom_call.1} parent=39 // pred_check
          %p733 = pneg %p90
        $region42: #{tpu_custom_call.1} parent=39 // pred_check_branch
          %735 = sbr.rel (%p733) target = $region44
        $region43: #{tpu_custom_call.1} parent=39 // pred_region
          %s736 = sand.u32 %s75, 1
          %s737 = scalar_lea.sflag [#allocation4], %s736
          %s738 = sand.u32 %s75, 1
          %s739 = smul.addr %s738, 64
          %s740 = scalar_lea.vmem [#allocation5], %s739
          %741 = dma.done %s737, 1024
        $region44: #{tpu_custom_call.1} parent=39 // pred_fallthru
          _
      $region40: #{tpu_custom_call.1} parent=5 // pred_fallthru
        _
    $region6: #{tpu_custom_call.1} parent=1 // loop_footer
      %s18 = sadd.s32 1, %s14
    $region7: #{tpu_custom_call.1} parent=1 // loop_footer_branch
      %13 = sbr.rel target = $region3
    $region8: #{tpu_custom_call.1} parent=1 // loop_exit
      _
    %742 = vsyncpa [#allocation3], 1
    %s743 = scalar_lea.sflag [#allocation3], 1
    %744 = vsyncpa %s743, 1
    %745 = vsyncpa [#allocation4], 1
    %s746 = scalar_lea.sflag [#allocation4], 1
    %747 = vsyncpa %s746, 1

</llo_original>
